<compile_context>
chip_gen: v7x
topology: tpu7x:2x2x1
jax: 0.10.0
libtpu: 0.0.40
codegen_flags: <defaults>
</compile_context>

<pallas_src>
import functools

import jax
import jax.numpy as jnp
from jax.experimental import pallas as pl
from jax.experimental.pallas import tpu as pltpu

MAX_ACTION = 1.0       # hardcoded to 1 in the PyTorch __init__
HID1, HID2 = 128, 64   # fc1 / fc2 widths
OUT_PAD = 128          # lane-dense padded fc3 output width
TILE_B_DEFAULT = 512   # rows per grid step (safe for v5e/v6e/v7x VMEM)


def _round_up(x, m):
    return ((x + m - 1) // m) * m


def actor_kernel(state_ref, w1_ref, b1_ref, w2_ref, b2_ref, w3_ref, b3_ref,
                 out_ref):
    # fc1 + tanh   (MXU accumulates in f32; bias add / tanh in f32)
    a = jnp.tanh(
        jnp.dot(state_ref[...], w1_ref[...],
                preferred_element_type=jnp.float32) + b1_ref[...])
    # fc2 + tanh
    a = jnp.tanh(
        jnp.dot(a.astype(w2_ref.dtype), w2_ref[...],
                preferred_element_type=jnp.float32) + b2_ref[...])
    # fc3 + tanh  (output columns >= action_dim are zero-padded -> tanh(0)=0,
    # sliced off in the wrapper).  max_action == 1, so no scale here.
    out_ref[...] = jnp.tanh(
        jnp.dot(a.astype(w3_ref.dtype), w3_ref[...],
                preferred_element_type=jnp.float32) + b3_ref[...])


def actor_forward(state, params, *, tile_b=TILE_B_DEFAULT,
                  compute_dtype=jnp.float32):
    """state: (B, state_dim).  params: dict of w1,b1,w2,b2,w3,b3 (f32,
    weights stored (in, out)).  compute_dtype controls MXU input precision
    (float32, or bfloat16 on v6e/v7x for ~2x MXU + half the weight DMA)."""
    w1, b1, w2, b2, w3, b3 = (params["w1"], params["b1"], params["w2"],
                              params["b2"], params["w3"], params["b3"])
    batch, state_dim = state.shape
    action_dim = w3.shape[1]

    # ---- batch tiling (pad to a multiple of tile_b; tile_b multiple of 8) ----
    tile_b = min(tile_b, _round_up(batch, 8))
    padded_batch = _round_up(batch, tile_b)
    x = state.astype(compute_dtype)
    if padded_batch != batch:
        x = jnp.pad(x, ((0, padded_batch - batch), (0, 0)))
    num_tiles = pl.cdiv(padded_batch, tile_b)

    # ---- lane-dense output: zero-pad fc3 to OUT_PAD columns ----
    w3p = jnp.pad(w3, ((0, 0), (0, OUT_PAD - action_dim)))
    b3p = jnp.pad(b3, ((0, 0), (0, OUT_PAD - action_dim)))

    # Weights in compute_dtype (bf16 is fine as MXU input on all gens);
    # biases stay f32 (added to the f32 accumulator).
    w1c, w2c, w3c = (w1.astype(compute_dtype), w2.astype(compute_dtype),
                     w3p.astype(compute_dtype))
    b1f, b2f, b3f = (b1.astype(jnp.float32), b2.astype(jnp.float32),
                     b3p.astype(jnp.float32))

    # ---- VMEM budget: activations (double-buffered in/out) + weights ----
    itemsize = jnp.dtype(compute_dtype).itemsize
    act_bytes = tile_b * (state_dim * itemsize          # state tile
                          + (HID1 + HID2) * 4           # intermediates (f32)
                          + OUT_PAD * 4)                # output tile (f32)
    weight_bytes = ((state_dim * HID1 + HID1 * HID2 + HID2 * OUT_PAD) * itemsize
                    + (HID1 + HID2 + OUT_PAD) * 4)
    vmem_limit = min(max(4 * act_bytes + 2 * weight_bytes + (1 << 20),
                         4 << 20), 32 << 20)

    const_map = lambda i: (0, 0)
    out_padded = pl.pallas_call(
        actor_kernel,
        out_shape=jax.ShapeDtypeStruct((padded_batch, OUT_PAD), jnp.float32),
        grid=(num_tiles,),
        in_specs=[
            pl.BlockSpec((tile_b, state_dim), lambda i: (i, 0)),   # state tile
            pl.BlockSpec(w1c.shape, const_map),                    # VMEM-resident
            pl.BlockSpec(b1f.shape, const_map),
            pl.BlockSpec(w2c.shape, const_map),
            pl.BlockSpec(b2f.shape, const_map),
            pl.BlockSpec(w3c.shape, const_map),
            pl.BlockSpec(b3f.shape, const_map),
        ],
        out_specs=pl.BlockSpec((tile_b, OUT_PAD), lambda i: (i, 0)),
        compiler_params=pltpu.CompilerParams(
            dimension_semantics=("parallel",),
            vmem_limit_bytes=int(vmem_limit)),
    )(x, w1c, b1f, w2c, b2f, w3c, b3f)

    out = out_padded[:batch, :action_dim]
    if MAX_ACTION != 1.0:          # folded away when max_action == 1
        out = out * MAX_ACTION
    return out


def init_actor_params(key, state_dim, action_dim):
    """Deterministic init mimicking PyTorch nn.Linear default
    (uniform(-1/sqrt(fan_in), 1/sqrt(fan_in))).  Weights stored (in, out)."""
    def linear(key, fan_in, fan_out):
        kw, kb = jax.random.split(key)
        bound = 1.0 / jnp.sqrt(jnp.float32(fan_in))
        w = jax.random.uniform(kw, (fan_in, fan_out), jnp.float32,
                               minval=-bound, maxval=bound)
        b = jax.random.uniform(kb, (1, fan_out), jnp.float32,
                               minval=-bound, maxval=bound)
        return w, b

    k1, k2, k3 = jax.random.split(key, 3)
    w1, b1 = linear(k1, state_dim, HID1)
    w2, b2 = linear(k2, HID1, HID2)
    w3, b3 = linear(k3, HID2, action_dim)
    return {"w1": w1, "b1": b1, "w2": w2, "b2": b2, "w3": w3, "b3": b3}


def _reference(state, params):
    a = jnp.tanh(state @ params["w1"] + params["b1"])
    a = jnp.tanh(a @ params["w2"] + params["b2"])
    return jnp.tanh(a @ params["w3"] + params["b3"]) * MAX_ACTION


if __name__ == "__main__":
    key = jax.random.PRNGKey(0)
    k_state, k_params, k_big = jax.random.split(key, 3)

    batch = 2
    state_dim = 16   # env.observation_space.shape[0] (synthetic)
    action_dim = 4   # env.action_space.shape[0]      (synthetic)

    state = jax.random.normal(k_state, (batch, state_dim), jnp.float32)
    params = init_actor_params(k_params, state_dim, action_dim)

    # f32 path (exact match to reference)
    out = actor_forward(state, params)
    jax.block_until_ready(out)
    ref = _reference(state, params)
    assert out.shape == (batch, action_dim)
    assert jnp.allclose(out, ref, atol=1e-5, rtol=1e-5)

    # bf16-MXU path on a training-sized, non-divisible batch (exercises the
    # grid, padding, and lane-dense output).
    big_batch = 1000
    big_state = jax.random.normal(k_big, (big_batch, state_dim), jnp.float32)
    out_bf16 = actor_forward(big_state, params, compute_dtype=jnp.bfloat16)
    jax.block_until_ready(out_bf16)
    ref_big = _reference(big_state, params)
    assert out_bf16.shape == (big_batch, action_dim)
    assert jnp.allclose(out_bf16, ref_big, atol=3e-2, rtol=3e-2)

    print("KERNEL_OK")
</pallas_src>

<mosaic_0001>
module attributes {stable_mosaic.version = 11 : i64} {
  func.func @actor_kernel(%arg0: i32, %arg1: memref<8x16xf32, #tpu.memory_space<vmem>>, %arg2: memref<16x128xf32, #tpu.memory_space<vmem>>, %arg3: memref<1x128xf32, #tpu.memory_space<vmem>>, %arg4: memref<128x64xf32, #tpu.memory_space<vmem>>, %arg5: memref<1x64xf32, #tpu.memory_space<vmem>>, %arg6: memref<64x128xf32, #tpu.memory_space<vmem>>, %arg7: memref<1x128xf32, #tpu.memory_space<vmem>>, %arg8: memref<8x128xf32, #tpu.memory_space<vmem>>) attributes {dimension_semantics = [#tpu.dimension_semantics<parallel>], iteration_bounds = array<i64: 1>, scalar_prefetch = 0 : i64, scratch_operands = 0 : i64, tpu.core_type = #tpu.core_type<tc>, window_params = [{transform_indices = @transform_0, window_bounds = array<i64: 8, 16>}, {pipeline_mode = #tpu.pipeline_mode<synchronous>, transform_indices = @transform_1, window_bounds = array<i64: 16, 128>}, {pipeline_mode = #tpu.pipeline_mode<synchronous>, transform_indices = @transform_2, window_bounds = array<i64: 1, 128>}, {pipeline_mode = #tpu.pipeline_mode<synchronous>, transform_indices = @transform_3, window_bounds = array<i64: 128, 64>}, {pipeline_mode = #tpu.pipeline_mode<synchronous>, transform_indices = @transform_4, window_bounds = array<i64: 1, 64>}, {pipeline_mode = #tpu.pipeline_mode<synchronous>, transform_indices = @transform_5, window_bounds = array<i64: 64, 128>}, {pipeline_mode = #tpu.pipeline_mode<synchronous>, transform_indices = @transform_6, window_bounds = array<i64: 1, 128>}, {transform_indices = @transform_7, window_bounds = array<i64: 8, 128>}]} {
    %c0 = arith.constant 0 : index
    %c0_0 = arith.constant 0 : index
    %0 = vector.load %arg1[%c0, %c0_0] : memref<8x16xf32, #tpu.memory_space<vmem>>, vector<8x16xf32>
    %c0_1 = arith.constant 0 : index
    %c0_2 = arith.constant 0 : index
    %1 = vector.load %arg2[%c0_1, %c0_2] : memref<16x128xf32, #tpu.memory_space<vmem>>, vector<16x128xf32>
    %cst = arith.constant dense<0.000000e+00> : vector<8x128xf32>
    %2 = tpu.matmul %0, %1, %cst {dimension_numbers = #tpu.dot_dimension_numbers<[1], [0], [0], [1], [0, 0, 1, 1], [], []>} : vector<8x16xf32>, vector<16x128xf32>, vector<8x128xf32> -> vector<8x128xf32>
    %c0_3 = arith.constant 0 : index
    %c0_4 = arith.constant 0 : index
    %3 = vector.load %arg3[%c0_3, %c0_4] : memref<1x128xf32, #tpu.memory_space<vmem>>, vector<1x128xf32>
    %4 = vector.broadcast %3 : vector<1x128xf32> to vector<8x128xf32>
    %5 = arith.addf %2, %4 : vector<8x128xf32>
    %6 = math.tanh %5 : vector<8x128xf32>
    %c0_5 = arith.constant 0 : index
    %c0_6 = arith.constant 0 : index
    %7 = vector.load %arg4[%c0_5, %c0_6] : memref<128x64xf32, #tpu.memory_space<vmem>>, vector<128x64xf32>
    %cst_7 = arith.constant dense<0.000000e+00> : vector<8x64xf32>
    %8 = tpu.matmul %6, %7, %cst_7 {dimension_numbers = #tpu.dot_dimension_numbers<[1], [0], [0], [1], [0, 0, 1, 1], [], []>} : vector<8x128xf32>, vector<128x64xf32>, vector<8x64xf32> -> vector<8x64xf32>
    %c0_8 = arith.constant 0 : index
    %c0_9 = arith.constant 0 : index
    %9 = vector.load %arg5[%c0_8, %c0_9] : memref<1x64xf32, #tpu.memory_space<vmem>>, vector<1x64xf32>
    %10 = vector.broadcast %9 : vector<1x64xf32> to vector<8x64xf32>
    %11 = arith.addf %8, %10 : vector<8x64xf32>
    %12 = math.tanh %11 : vector<8x64xf32>
    %c0_10 = arith.constant 0 : index
    %c0_11 = arith.constant 0 : index
    %13 = vector.load %arg6[%c0_10, %c0_11] : memref<64x128xf32, #tpu.memory_space<vmem>>, vector<64x128xf32>
    %cst_12 = arith.constant dense<0.000000e+00> : vector<8x128xf32>
    %14 = tpu.matmul %12, %13, %cst_12 {dimension_numbers = #tpu.dot_dimension_numbers<[1], [0], [0], [1], [0, 0, 1, 1], [], []>} : vector<8x64xf32>, vector<64x128xf32>, vector<8x128xf32> -> vector<8x128xf32>
    %c0_13 = arith.constant 0 : index
    %c0_14 = arith.constant 0 : index
    %15 = vector.load %arg7[%c0_13, %c0_14] : memref<1x128xf32, #tpu.memory_space<vmem>>, vector<1x128xf32>
    %16 = vector.broadcast %15 : vector<1x128xf32> to vector<8x128xf32>
    %17 = arith.addf %14, %16 : vector<8x128xf32>
    %18 = math.tanh %17 : vector<8x128xf32>
    %c0_15 = arith.constant 0 : index
    %c0_16 = arith.constant 0 : index
    %19 = vector.load %arg8[%c0_15, %c0_16] : memref<8x128xf32, #tpu.memory_space<vmem>>, vector<8x128xf32>
    tpu.vector_store %arg8[%c0_15, %c0_16], %18 {strides = array<i32>} : memref<8x128xf32, #tpu.memory_space<vmem>>, vector<8x128xf32>,
    return
  }
  func.func @transform_0(%arg0: i32) -> (i32, i32) {
    %c0_i32 = arith.constant 0 : i32
    %c0_i32_0 = arith.constant 0 : i32
    return %arg0, %c0_i32 : i32, i32
  }
  func.func @transform_1(%arg0: i32) -> (i32, i32) {
    %c0_i32 = arith.constant 0 : i32
    %c0_i32_0 = arith.constant 0 : i32
    %c0_i32_1 = arith.constant 0 : i32
    return %c0_i32, %c0_i32_0 : i32, i32
  }
  func.func @transform_2(%arg0: i32) -> (i32, i32) {
    %c0_i32 = arith.constant 0 : i32
    %c0_i32_0 = arith.constant 0 : i32
    %c0_i32_1 = arith.constant 0 : i32
    return %c0_i32, %c0_i32_0 : i32, i32
  }
  func.func @transform_3(%arg0: i32) -> (i32, i32) {
    %c0_i32 = arith.constant 0 : i32
    %c0_i32_0 = arith.constant 0 : i32
    %c0_i32_1 = arith.constant 0 : i32
    return %c0_i32, %c0_i32_0 : i32, i32
  }
  func.func @transform_4(%arg0: i32) -> (i32, i32) {
    %c0_i32 = arith.constant 0 : i32
    %c0_i32_0 = arith.constant 0 : i32
    %c0_i32_1 = arith.constant 0 : i32
    return %c0_i32, %c0_i32_0 : i32, i32
  }
  func.func @transform_5(%arg0: i32) -> (i32, i32) {
    %c0_i32 = arith.constant 0 : i32
    %c0_i32_0 = arith.constant 0 : i32
    %c0_i32_1 = arith.constant 0 : i32
    return %c0_i32, %c0_i32_0 : i32, i32
  }
  func.func @transform_6(%arg0: i32) -> (i32, i32) {
    %c0_i32 = arith.constant 0 : i32
    %c0_i32_0 = arith.constant 0 : i32
    %c0_i32_1 = arith.constant 0 : i32
    return %c0_i32, %c0_i32_0 : i32, i32
  }
  func.func @transform_7(%arg0: i32) -> (i32, i32) {
    %c0_i32 = arith.constant 0 : i32
    %c0_i32_0 = arith.constant 0 : i32
    return %arg0, %c0_i32 : i32, i32
  }
}

</mosaic_0001>

<llo_original>
// kernel: tpu_custom_call.1
$region0: #{tpu_custom_call.1}
  #allocation0 [shape = 'u32[]', space=smem, size = 0x4, offset = 0x4, fixed_abs, tag = 'smem constant byte address 0x4 - core index']
  #allocation1 [shape = 'u32[144,128]{1,0:T(1,128)}', space=vmem, size = 0x12000, scoped, tag = 'internal scratch']
  %s0 = inlined_call_operand.vmem [shape: f32[8,16], index: 0, kind: input, shape index: {}]
  %s1 = inlined_call_operand.vmem [shape: f32[16,128], index: 1, kind: input, shape index: {}]
  %s2 = inlined_call_operand.vmem [shape: f32[1,128], index: 2, kind: input, shape index: {}]
  %s3 = inlined_call_operand.vmem [shape: f32[128,64], index: 3, kind: input, shape index: {}]
  %s4 = inlined_call_operand.vmem [shape: f32[1,64], index: 4, kind: input, shape index: {}]
  %s5 = inlined_call_operand.vmem [shape: f32[64,128], index: 5, kind: input, shape index: {}]
  %s6 = inlined_call_operand.vmem [shape: f32[1,128], index: 6, kind: input, shape index: {}]
  %s7 = inlined_call_operand.hbm [shape: f32[8,128], index: 7, kind: output, shape index: {}]
  %s8 = sld [smem:[#allocation0]]
  $region38: #{tpu_custom_call.1} parent=0
    _
  %s10 = ssub.s32 1, %s8
  %s11 = scalar_select 0, %s10, %s8
  $region1: #{tpu_custom_call.1} parent=0
    #allocation2 [shape = 'u8[4096]{0}', space=vmem, size = 0x1000, scoped, tag = 'output window, operand 0, single buffered']
    #allocation3 [shape = 's32[1]{0}', space=sflag, size = 0x4, scoped, tag = 'scoped memory for tpu_custom_call.1']
    %12 = vsyncpa [#allocation3], 0
    // Predicated region
    $region2: #{tpu_custom_call.1} parent=1 // pred_check
      _
    $region3: #{tpu_custom_call.1} parent=1 // pred_check_branch
      %14 = sbr.rel (0) target = $region5
    $region4: #{tpu_custom_call.1} parent=1 // pred_region
      _
    $region5: #{tpu_custom_call.1} parent=1 // pred_fallthru
      _
    // Predicated region
    $region6: #{tpu_custom_call.1} parent=1 // pred_check
      _
    $region7: #{tpu_custom_call.1} parent=1 // pred_check_branch
      %16 = sbr.rel (0) target = $region9
    $region8: #{tpu_custom_call.1} parent=1 // pred_region
      _
    $region9: #{tpu_custom_call.1} parent=1 // pred_fallthru
      _
    // Predicated region
    $region10: #{tpu_custom_call.1} parent=1 // pred_check
      _
    $region11: #{tpu_custom_call.1} parent=1 // pred_check_branch
      %18 = sbr.rel (0) target = $region13
    $region12: #{tpu_custom_call.1} parent=1 // pred_region
      _
    $region13: #{tpu_custom_call.1} parent=1 // pred_fallthru
      _
    // Predicated region
    $region14: #{tpu_custom_call.1} parent=1 // pred_check
      _
    $region15: #{tpu_custom_call.1} parent=1 // pred_check_branch
      %20 = sbr.rel (0) target = $region17
    $region16: #{tpu_custom_call.1} parent=1 // pred_region
      _
    $region17: #{tpu_custom_call.1} parent=1 // pred_fallthru
      _
    // Predicated region
    $region18: #{tpu_custom_call.1} parent=1 // pred_check
      _
    $region19: #{tpu_custom_call.1} parent=1 // pred_check_branch
      %22 = sbr.rel (0) target = $region21
    $region20: #{tpu_custom_call.1} parent=1 // pred_region
      _
    $region21: #{tpu_custom_call.1} parent=1 // pred_fallthru
      _
    // Predicated region
    $region22: #{tpu_custom_call.1} parent=1 // pred_check
      _
    $region23: #{tpu_custom_call.1} parent=1 // pred_check_branch
      %24 = sbr.rel (0) target = $region25
    $region24: #{tpu_custom_call.1} parent=1 // pred_region
      _
    $region25: #{tpu_custom_call.1} parent=1 // pred_fallthru
      _
    // Predicated region
    $region26: #{tpu_custom_call.1} parent=1 // pred_check
      _
    $region27: #{tpu_custom_call.1} parent=1 // pred_check_branch
      %26 = sbr.rel (0) target = $region29
    $region28: #{tpu_custom_call.1} parent=1 // pred_region
      _
    $region29: #{tpu_custom_call.1} parent=1 // pred_fallthru
      _
    %v27 = vld [vmem:[%s0] sm:$0xff]
    %v28 = vld [vmem:[%s1] sm:$0xff]
    %v29 = vld [vmem:[%s1 + $0x8] sm:$0xff]
    %v30 = vld [vmem:[%s2] sm:$0x1]
    %v32 = vlaneseq
    %v33 = vshrl.u32 %v32, 7
    %v34 = vsub.s32 0, %v33
    %v35 = vrot.slane %v30, %v34
    %vm37 = vcmask 130048
    %v39 = vsel %vm37, %v27, 0
    %41 = vmatprep.subr.mxu0 0.0
    %42 = vmatpush1.msra.mxu0 %v28
    %43 = vmatprep.subr.mxu0 0.0
    %44 = vmatpush1.msra.mxu0 %v29
    %45 = vmatprep.subr.mxu0 0.0
    %46 = vmatpush1.msra.mxu0 0.0
    %47 = vmatprep.subr.mxu0 0.0
    %48 = vmatpush1.msra.mxu0 0.0
    %49 = vmatprep.subr.mxu0 0.0
    %50 = vmatpush1.msra.mxu0 0.0
    %51 = vmatprep.subr.mxu0 0.0
    %52 = vmatpush1.msra.mxu0 0.0
    %53 = vmatprep.subr.mxu0 0.0
    %54 = vmatpush1.msra.mxu0 0.0
    %55 = vmatprep.subr.mxu0 0.0
    %56 = vmatpush1.msra.mxu0 0.0
    %57 = vmatprep.subr.mxu0 0.0
    %58 = vmatpush1.msra.mxu0 0.0
    %59 = vmatprep.subr.mxu0 0.0
    %60 = vmatpush1.msra.mxu0 0.0
    %61 = vmatprep.subr.mxu0 0.0
    %62 = vmatpush1.msra.mxu0 0.0
    %63 = vmatprep.subr.mxu0 0.0
    %64 = vmatpush1.msra.mxu0 0.0
    %65 = vmatprep.subr.mxu0 0.0
    %66 = vmatpush1.msra.mxu0 0.0
    %67 = vmatprep.subr.mxu0 0.0
    %68 = vmatpush1.msra.mxu0 0.0
    %69 = vmatprep.subr.mxu0 0.0
    %70 = vmatpush1.msra.mxu0 0.0
    %71 = vmatprep.subr.mxu0 0.0
    %72 = vmatpush1.msra.mxu0 0.0
    %73 = vmatprep.subr.mxu0 0.0
    %74 = vmatpush1.msra.mxu0 0.0
    %75 = vmatprep.subr.mxu0 0.0
    %76 = vmatpush1.msra.mxu0 0.0
    %77 = vmatprep.subr.mxu0 0.0
    %78 = vmatpush1.msra.mxu0 0.0
    %79 = vmatprep.subr.mxu0 0.0
    %80 = vmatpush1.msra.mxu0 0.0
    %81 = vmatprep.subr.mxu0 0.0
    %82 = vmatpush1.msra.mxu0 0.0
    %83 = vmatprep.subr.mxu0 0.0
    %84 = vmatpush1.msra.mxu0 0.0
    %85 = vmatprep.subr.mxu0 0.0
    %86 = vmatpush1.msra.mxu0 0.0
    %87 = vmatprep.subr.mxu0 0.0
    %88 = vmatpush1.msra.mxu0 0.0
    %89 = vmatprep.subr.mxu0 0.0
    %90 = vmatpush1.msra.mxu0 0.0
    %91 = vmatprep.subr.mxu0 0.0
    %92 = vmatpush1.msra.mxu0 0.0
    %93 = vmatprep.subr.mxu0 0.0
    %94 = vmatpush1.msra.mxu0 0.0
    %95 = vmatprep.subr.mxu0 0.0
    %96 = vmatpush1.msra.mxu0 0.0
    %97 = vmatprep.subr.mxu0 0.0
    %98 = vmatpush1.msra.mxu0 0.0
    %99 = vmatprep.subr.mxu0 0.0
    %100 = vmatpush1.msra.mxu0 0.0
    %101 = vmatprep.subr.mxu0 0.0
    %102 = vmatpush1.msra.mxu0 0.0
    %103 = vmatprep.subr.mxu0 0.0
    %104 = vmatpush1.msra.mxu0 0.0
    %105 = vmatprep.mubr.f32.mxu0 0.0
    %106 = vmatmul.mubr.f32.gmra.mrb[0].mxu0 %v39
    %v107 = vpop.f32.mrb[0].mxu0
    %v108 = vadd.f32 %v35, %v107
    %v109 = vpop.f32.mrb[0].mxu0
    %110 = vdwg.mxu0
    %v111 = vtanh.pop %v108
    %v112 = vld [vmem:[%s3] sm:$0xff]
    %v113 = vld [vmem:[%s3 + $0x8] sm:$0xff]
    %v114 = vld [vmem:[%s3 + $0x10] sm:$0xff]
    %v115 = vld [vmem:[%s3 + $0x18] sm:$0xff]
    %v116 = vld [vmem:[%s3 + $0x20] sm:$0xff]
    %v117 = vld [vmem:[%s3 + $0x28] sm:$0xff]
    %v118 = vld [vmem:[%s3 + $0x30] sm:$0xff]
    %v119 = vld [vmem:[%s3 + $0x38] sm:$0xff]
    %v120 = vld [vmem:[%s3 + $0x40] sm:$0xff]
    %v121 = vld [vmem:[%s3 + $0x48] sm:$0xff]
    %v122 = vld [vmem:[%s3 + $0x50] sm:$0xff]
    %v123 = vld [vmem:[%s3 + $0x58] sm:$0xff]
    %v124 = vld [vmem:[%s3 + $0x60] sm:$0xff]
    %v125 = vld [vmem:[%s3 + $0x68] sm:$0xff]
    %v126 = vld [vmem:[%s3 + $0x70] sm:$0xff]
    %v127 = vld [vmem:[%s3 + $0x78] sm:$0xff]
    %v128 = vld [vmem:[%s4] sm:$0x1]
    %v130 = vlaneseq
    %v131 = vshrl.u32 %v130, 7
    %v132 = vsub.s32 0, %v131
    %v133 = vrot.slane %v128, %v132
    %135 = vmatprep.subr.mxu0 0.0
    %136 = vmatpush1.msra.mxu0 %v112
    %137 = vmatprep.subr.mxu0 0.0
    %138 = vmatpush1.msra.mxu0 %v113
    %139 = vmatprep.subr.mxu0 0.0
    %140 = vmatpush1.msra.mxu0 %v114
    %141 = vmatprep.subr.mxu0 0.0
    %142 = vmatpush1.msra.mxu0 %v115
    %143 = vmatprep.subr.mxu0 0.0
    %144 = vmatpush1.msra.mxu0 %v116
    %145 = vmatprep.subr.mxu0 0.0
    %146 = vmatpush1.msra.mxu0 %v117
    %147 = vmatprep.subr.mxu0 0.0
    %148 = vmatpush1.msra.mxu0 %v118
    %149 = vmatprep.subr.mxu0 0.0
    %150 = vmatpush1.msra.mxu0 %v119
    %151 = vmatprep.subr.mxu0 0.0
    %152 = vmatpush1.msra.mxu0 %v120
    %153 = vmatprep.subr.mxu0 0.0
    %154 = vmatpush1.msra.mxu0 %v121
    %155 = vmatprep.subr.mxu0 0.0
    %156 = vmatpush1.msra.mxu0 %v122
    %157 = vmatprep.subr.mxu0 0.0
    %158 = vmatpush1.msra.mxu0 %v123
    %159 = vmatprep.subr.mxu0 0.0
    %160 = vmatpush1.msra.mxu0 %v124
    %161 = vmatprep.subr.mxu0 0.0
    %162 = vmatpush1.msra.mxu0 %v125
    %163 = vmatprep.subr.mxu0 0.0
    %164 = vmatpush1.msra.mxu0 %v126
    %165 = vmatprep.subr.mxu0 0.0
    %166 = vmatpush1.msra.mxu0 %v127
    %167 = vmatprep.subr.mxu0 0.0
    %168 = vmatpush1.msra.mxu0 0.0
    %169 = vmatprep.subr.mxu0 0.0
    %170 = vmatpush1.msra.mxu0 0.0
    %171 = vmatprep.subr.mxu0 0.0
    %172 = vmatpush1.msra.mxu0 0.0
    %173 = vmatprep.subr.mxu0 0.0
    %174 = vmatpush1.msra.mxu0 0.0
    %175 = vmatprep.subr.mxu0 0.0
    %176 = vmatpush1.msra.mxu0 0.0
    %177 = vmatprep.subr.mxu0 0.0
    %178 = vmatpush1.msra.mxu0 0.0
    %179 = vmatprep.subr.mxu0 0.0
    %180 = vmatpush1.msra.mxu0 0.0
    %181 = vmatprep.subr.mxu0 0.0
    %182 = vmatpush1.msra.mxu0 0.0
    %183 = vmatprep.subr.mxu0 0.0
    %184 = vmatpush1.msra.mxu0 0.0
    %185 = vmatprep.subr.mxu0 0.0
    %186 = vmatpush1.msra.mxu0 0.0
    %187 = vmatprep.subr.mxu0 0.0
    %188 = vmatpush1.msra.mxu0 0.0
    %189 = vmatprep.subr.mxu0 0.0
    %190 = vmatpush1.msra.mxu0 0.0
    %191 = vmatprep.subr.mxu0 0.0
    %192 = vmatpush1.msra.mxu0 0.0
    %193 = vmatprep.subr.mxu0 0.0
    %194 = vmatpush1.msra.mxu0 0.0
    %195 = vmatprep.subr.mxu0 0.0
    %196 = vmatpush1.msra.mxu0 0.0
    %197 = vmatprep.subr.mxu0 0.0
    %198 = vmatpush1.msra.mxu0 0.0
    %199 = vmatprep.mubr.f32.mxu0 0.0
    %200 = vmatmul.mubr.f32.gmra.mrb[0].mxu0 %v111
    %v201 = vpop.f32.mrb[0].mxu0
    %v202 = vadd.f32 %v133, %v201
    %v203 = vpop.f32.mrb[0].mxu0
    %204 = vdwg.mxu0
    %v205 = vtanh.pop %v202
    %v206 = vld [vmem:[%s5] sm:$0xff]
    %v207 = vld [vmem:[%s5 + $0x8] sm:$0xff]
    %v208 = vld [vmem:[%s5 + $0x10] sm:$0xff]
    %v209 = vld [vmem:[%s5 + $0x18] sm:$0xff]
    %v210 = vld [vmem:[%s5 + $0x20] sm:$0xff]
    %v211 = vld [vmem:[%s5 + $0x28] sm:$0xff]
    %v212 = vld [vmem:[%s5 + $0x30] sm:$0xff]
    %v213 = vld [vmem:[%s5 + $0x38] sm:$0xff]
    %v214 = vld [vmem:[%s6] sm:$0x1]
    %v216 = vlaneseq
    %v217 = vshrl.u32 %v216, 7
    %v218 = vsub.s32 0, %v217
    %v219 = vrot.slane %v214, %v218
    %vm221 = vcmask 523264
    %v223 = vsel %vm221, %v205, 0
    %225 = vmatprep.subr.mxu0 0.0
    %226 = vmatpush1.msra.mxu0 %v206
    %227 = vmatprep.subr.mxu0 0.0
    %228 = vmatpush1.msra.mxu0 %v207
    %229 = vmatprep.subr.mxu0 0.0
    %230 = vmatpush1.msra.mxu0 %v208
    %231 = vmatprep.subr.mxu0 0.0
    %232 = vmatpush1.msra.mxu0 %v209
    %233 = vmatprep.subr.mxu0 0.0
    %234 = vmatpush1.msra.mxu0 %v210
    %235 = vmatprep.subr.mxu0 0.0
    %236 = vmatpush1.msra.mxu0 %v211
    %237 = vmatprep.subr.mxu0 0.0
    %238 = vmatpush1.msra.mxu0 %v212
    %239 = vmatprep.subr.mxu0 0.0
    %240 = vmatpush1.msra.mxu0 %v213
    %241 = vmatprep.subr.mxu0 0.0
    %242 = vmatpush1.msra.mxu0 0.0
    %243 = vmatprep.subr.mxu0 0.0
    %244 = vmatpush1.msra.mxu0 0.0
    %245 = vmatprep.subr.mxu0 0.0
    %246 = vmatpush1.msra.mxu0 0.0
    %247 = vmatprep.subr.mxu0 0.0
    %248 = vmatpush1.msra.mxu0 0.0
    %249 = vmatprep.subr.mxu0 0.0
    %250 = vmatpush1.msra.mxu0 0.0
    %251 = vmatprep.subr.mxu0 0.0
    %252 = vmatpush1.msra.mxu0 0.0
    %253 = vmatprep.subr.mxu0 0.0
    %254 = vmatpush1.msra.mxu0 0.0
    %255 = vmatprep.subr.mxu0 0.0
    %256 = vmatpush1.msra.mxu0 0.0
    %257 = vmatprep.subr.mxu0 0.0
    %258 = vmatpush1.msra.mxu0 0.0
    %259 = vmatprep.subr.mxu0 0.0
    %260 = vmatpush1.msra.mxu0 0.0
    %261 = vmatprep.subr.mxu0 0.0
    %262 = vmatpush1.msra.mxu0 0.0
    %263 = vmatprep.subr.mxu0 0.0
    %264 = vmatpush1.msra.mxu0 0.0
    %265 = vmatprep.subr.mxu0 0.0
    %266 = vmatpush1.msra.mxu0 0.0
    %267 = vmatprep.subr.mxu0 0.0
    %268 = vmatpush1.msra.mxu0 0.0
    %269 = vmatprep.subr.mxu0 0.0
    %270 = vmatpush1.msra.mxu0 0.0
    %271 = vmatprep.subr.mxu0 0.0
    %272 = vmatpush1.msra.mxu0 0.0
    %273 = vmatprep.subr.mxu0 0.0
    %274 = vmatpush1.msra.mxu0 0.0
    %275 = vmatprep.subr.mxu0 0.0
    %276 = vmatpush1.msra.mxu0 0.0
    %277 = vmatprep.subr.mxu0 0.0
    %278 = vmatpush1.msra.mxu0 0.0
    %279 = vmatprep.subr.mxu0 0.0
    %280 = vmatpush1.msra.mxu0 0.0
    %281 = vmatprep.subr.mxu0 0.0
    %282 = vmatpush1.msra.mxu0 0.0
    %283 = vmatprep.subr.mxu0 0.0
    %284 = vmatpush1.msra.mxu0 0.0
    %285 = vmatprep.subr.mxu0 0.0
    %286 = vmatpush1.msra.mxu0 0.0
    %287 = vmatprep.subr.mxu0 0.0
    %288 = vmatpush1.msra.mxu0 0.0
    %289 = vmatprep.mubr.f32.mxu0 0.0
    %290 = vmatmul.mubr.f32.gmra.mrb[0].mxu0 %v223
    %v291 = vpop.f32.mrb[0].mxu0
    %v292 = vadd.f32 %v219, %v291
    %v293 = vpop.f32.mrb[0].mxu0
    %294 = vdwg.mxu0
    %v295 = vtanh.pop %v292
    %296 = vst [vmem:[#allocation2] sm:$0xff] %v295
    // Predicated region
    $region30: #{tpu_custom_call.1} parent=1 // pred_check
      _
    $region31: #{tpu_custom_call.1} parent=1 // pred_check_branch
      %298 = sbr.rel (0) target = $region33
    $region32: #{tpu_custom_call.1} parent=1 // pred_region
      %s300 = ssub.s32 128, 128
      %301 = vsyncadd [#allocation3], %s300
      %s303 = sshll.u32 [#allocation2], 4
      %s304 = int_to_ptr.vmem [resolvable:$true] %s303
      %306 = dma.vmem_to_hbm [thread:$0]  %s304, 128, %s7, [#allocation3]
    $region33: #{tpu_custom_call.1} parent=1 // pred_fallthru
      _
    // Predicated region
    $region34: #{tpu_custom_call.1} parent=1 // pred_check
      _
    $region35: #{tpu_custom_call.1} parent=1 // pred_check_branch
      %308 = sbr.rel (0) target = $region37
    $region36: #{tpu_custom_call.1} parent=1 // pred_region
      %309 = dma.done [#allocation3], 128
    $region37: #{tpu_custom_call.1} parent=1 // pred_fallthru
      _
    %310 = vsyncpa [#allocation3], 1

</llo_original>
